<compile_context>
chip_gen: v7x
topology: tpu7x:2x2x1
jax: 0.10.0
libtpu: 0.0.40
codegen_flags: <defaults>
</compile_context>

<pallas_src>
import functools

import jax
import jax.numpy as jnp
from jax import lax
from jax.experimental import pallas as pl
from jax.experimental.pallas import tpu as pltpu

EPS = 1e-12  # torch.nn.functional.normalize default eps


def _round_up(n, m):
    return (n + m - 1) // m * m


def _vmem_limit_bytes():
    """Generation-aware scoped-VMEM limit (v5e/v6e: ~96 MiB, v7x: ~48 MiB)."""
    try:
        cap = pltpu.get_tpu_info().vmem_capacity_bytes
    except Exception:
        cap = 64 * 1024 * 1024  # conservative (v7x-sized) fallback
    return max(32 * 1024 * 1024, min(int(cap) * 3 // 4, 96 * 1024 * 1024))


def _amsoftmax_train_kernel(x_ref, w_ref, sxi_ref, bias_ref, lab_ref,
                            logits_ref, rloss_ref,
                            l_sc, tgt_sc,
                            *, margin, scale, tile_c):
    """Grid = (batch_tiles, class_tiles); class axis is the reduction axis."""
    j = pl.program_id(1)

    @pl.when(j == 0)
    def _init():
        l_sc[...] = jnp.zeros_like(l_sc)
        tgt_sc[...] = jnp.zeros_like(tgt_sc)

    # bf16 (or f32) MXU matmul with f32 accumulation.  W columns are already
    # unit-normalized in the wrapper; scale/||x|| is applied post-matmul.
    costh_raw = jnp.dot(x_ref[...], w_ref[...],
                        preferred_element_type=jnp.float32)        # (TB, TC)
    s_cos = costh_raw * sxi_ref[...]                               # scale*cos

    col_ids = j * tile_c + lax.broadcasted_iota(jnp.int32, s_cos.shape, 1)
    onehot = col_ids == lab_ref[...]                               # (TB, TC)
    logits = s_cos - jnp.where(onehot, scale * margin, 0.0)        # costh_m_s
    logits_ref[...] = logits.astype(logits_ref.dtype)

    # LSE with the static bound K = scale (cos <= 1 => exp(logit - K) <= ~1),
    # so no running max / rescale.  Padded class columns get bias = -1e30.
    s_m = logits + bias_ref[...]
    l_sc[...] += jnp.sum(jnp.exp(s_m - scale), axis=1, keepdims=True)
    tgt_sc[...] += jnp.sum(jnp.where(onehot, logits, 0.0), axis=1,
                           keepdims=True)

    @pl.when(j == pl.num_programs(1) - 1)
    def _finalize():
        # per-row cross-entropy: logsumexp - target_logit
        rloss_ref[...] = scale + jnp.log(l_sc[...]) - tgt_sc[...]


def _cosine_kernel(x_ref, w_ref, invx_ref, out_ref):
    """Inference branch: cosine similarities only (no margin / scale)."""
    costh_raw = jnp.dot(x_ref[...], w_ref[...],
                        preferred_element_type=jnp.float32)
    out_ref[...] = (costh_raw * invx_ref[...]).astype(out_ref.dtype)


def amsoftmax_forward(x, W, label=None, *, margin=0.2, scale=15.0,
                      block_b=256, block_c=1024, mxu_dtype=jnp.bfloat16):
    """Pallas implementation of amsoftmax.forward.

    Returns (costh_m_s, loss) when label is given, else (cosine_logits, None).
    """
    B, D = x.shape
    D2, C = W.shape
    assert D == D2

    # Lane-dense class tiles (multiple of 128); batch tiles multiple of 8.
    # Bigger TB => fewer full W re-streams (W is re-read once per batch tile).
    TB = min(block_b, _round_up(B, 8))
    TC = min(block_c, _round_up(C, 128))
    B_pad = _round_up(B, TB)
    C_pad = _round_up(C, TC)
    vmem_limit = _vmem_limit_bytes()

    # --- wrapper-side, batch-independent preprocessing ---------------------
    xp = x if B_pad == B else jnp.pad(x, ((0, B_pad - B), (0, 0)))
    x32 = xp.astype(jnp.float32)
    # 1/max(||x||, eps) == rsqrt(max(||x||^2, eps^2))
    inv_x = lax.rsqrt(jnp.maximum(jnp.sum(x32 * x32, axis=1, keepdims=True),
                                  EPS * EPS))                      # (B_pad, 1)
    xp_mxu = xp.astype(mxu_dtype)

    W32 = W.astype(jnp.float32)
    inv_w = lax.rsqrt(jnp.maximum(jnp.sum(W32 * W32, axis=0, keepdims=True),
                                  EPS * EPS))
    Wn = W32 * inv_w                                    # unit-norm columns
    if C_pad != C:
        Wn = jnp.pad(Wn, ((0, 0), (0, C_pad - C)))      # padded cols exactly 0
    Wp_mxu = Wn.astype(mxu_dtype)

    grid = (B_pad // TB, C_pad // TC)
    x_spec = pl.BlockSpec((TB, D), lambda i, j: (i, 0))
    w_spec = pl.BlockSpec((D, TC), lambda i, j: (0, j))
    row_spec = pl.BlockSpec((TB, 1), lambda i, j: (i, 0))
    col_spec = pl.BlockSpec((1, TC), lambda i, j: (0, j))
    logits_spec = pl.BlockSpec((TB, TC), lambda i, j: (i, j))

    if label is None:
        logits = pl.pallas_call(
            _cosine_kernel,
            out_shape=jax.ShapeDtypeStruct((B_pad, C_pad), jnp.float32),
            grid_spec=pltpu.PrefetchScalarGridSpec(
                num_scalar_prefetch=0,
                grid=grid,
                in_specs=[x_spec, w_spec, row_spec],
                out_specs=logits_spec,
            ),
            compiler_params=pltpu.CompilerParams(
                dimension_semantics=("parallel", "parallel"),
                vmem_limit_bytes=vmem_limit,
            ),
        )(xp_mxu, Wp_mxu, inv_x)
        return logits[:B, :C], None

    assert label.shape[0] == B
    if label.ndim > 1:
        label = jnp.argmax(label, axis=1)
    # TODO(synk): torch raises ValueError for labels >= num_classes; a traced
    # kernel cannot raise, out-of-range labels simply get no margin/target.
    lab2d = label.astype(jnp.int32).reshape(B, 1)
    if B_pad != B:
        lab2d = jnp.pad(lab2d, ((0, B_pad - B), (0, 0)))

    # scale / ||x|| per row, and the additive mask row for padded classes.
    sxi = scale * inv_x                                            # (B_pad, 1)
    bias = jnp.where(jnp.arange(C_pad) < C, 0.0,
                     -1e30).reshape(1, C_pad).astype(jnp.float32)  # (1, C_pad)

    kernel = functools.partial(
        _amsoftmax_train_kernel,
        margin=float(margin), scale=float(scale), tile_c=TC,
    )
    logits, row_loss = pl.pallas_call(
        kernel,
        out_shape=(
            jax.ShapeDtypeStruct((B_pad, C_pad), jnp.float32),
            jax.ShapeDtypeStruct((B_pad, 1), jnp.float32),
        ),
        grid_spec=pltpu.PrefetchScalarGridSpec(
            num_scalar_prefetch=0,
            grid=grid,
            in_specs=[x_spec, w_spec, row_spec, col_spec, row_spec],
            out_specs=(logits_spec, row_spec),
            scratch_shapes=[pltpu.VMEM((TB, 1), jnp.float32)] * 2,
        ),
        compiler_params=pltpu.CompilerParams(
            dimension_semantics=("parallel", "arbitrary"),
            vmem_limit_bytes=vmem_limit,
        ),
    )(xp_mxu, Wp_mxu, sxi, bias, lab2d)

    loss = jnp.mean(row_loss[:B, 0])
    return logits[:B, :C], loss


def init_weight(key, feat_dim, num_classes):
    # xavier_normal_(W, gain=1) on a (feat_dim, num_classes) tensor.
    std = (2.0 / (feat_dim + num_classes)) ** 0.5
    return std * jax.random.normal(key, (feat_dim, num_classes),
                                   dtype=jnp.float32)


def _reference(x, W, label, margin, scale, mxu_dtype=jnp.float32):
    """Pure-JAX reference; mxu_dtype lets us emulate the kernel's MXU cast."""
    inv_x = 1.0 / jnp.maximum(jnp.linalg.norm(x, axis=1, keepdims=True), EPS)
    wn = W / jnp.maximum(jnp.linalg.norm(W, axis=0, keepdims=True), EPS)
    costh = jnp.dot(x.astype(mxu_dtype), wn.astype(mxu_dtype),
                    preferred_element_type=jnp.float32) * inv_x
    C = W.shape[1]
    logits = scale * costh - scale * margin * jax.nn.one_hot(
        label, C, dtype=jnp.float32)
    loss = jnp.mean(
        jax.nn.logsumexp(logits, axis=1)
        - jnp.take_along_axis(logits, label[:, None], axis=1)[:, 0])
    return costh, logits, loss


if __name__ == "__main__":
    margin, scale = 0.2, 15.0
    key = jax.random.PRNGKey(0)

    # --- Test A: small shapes, f32 MXU path (tight check vs f32 reference) ---
    B, D, C = 8, 32, 16
    kx, kw, kl, key = jax.random.split(key, 4)
    x = jax.random.normal(kx, (B, D), dtype=jnp.float32)
    W = init_weight(kw, D, C)
    label = jax.random.randint(kl, (B,), 0, C, dtype=jnp.int32)

    logits_f32, loss_f32 = amsoftmax_forward(x, W, label, margin=margin,
                                             scale=scale,
                                             mxu_dtype=jnp.float32)
    cos_f32, none_loss = amsoftmax_forward(x, W, None, mxu_dtype=jnp.float32)
    jax.block_until_ready((logits_f32, loss_f32, cos_f32))
    assert none_loss is None

    costh_ref, logits_ref_, loss_ref_ = _reference(x, W, label, margin, scale)
    assert jnp.allclose(logits_f32, logits_ref_, atol=1e-4)
    assert jnp.allclose(loss_f32, loss_ref_, atol=1e-4)
    assert jnp.allclose(cos_f32, costh_ref, atol=1e-4)

    # --- Test B: same shapes, default bf16 MXU path ---
    logits_bf, loss_bf = amsoftmax_forward(x, W, label, margin=margin,
                                           scale=scale)
    cos_bf, _ = amsoftmax_forward(x, W, None)
    jax.block_until_ready((logits_bf, loss_bf, cos_bf))
    # bf16 operands only perturb the cosine logits slightly.
    assert jnp.allclose(cos_bf, costh_ref, atol=2e-2)
    assert jnp.allclose(logits_bf, logits_ref_, atol=0.2)
    assert jnp.allclose(loss_bf, loss_ref_, atol=0.1)

    # --- Test C: multi-tile grid (static-K LSE across class tiles + padding) --
    B2, D2, C2 = 48, 96, 300
    kx, kw, kl, key = jax.random.split(key, 4)
    x2 = jax.random.normal(kx, (B2, D2), dtype=jnp.float32)
    W2 = init_weight(kw, D2, C2)
    label2 = jax.random.randint(kl, (B2,), 0, C2, dtype=jnp.int32)

    logits2, loss2 = amsoftmax_forward(x2, W2, label2, margin=margin,
                                       scale=scale, block_b=16, block_c=128)
    jax.block_until_ready((logits2, loss2))
    # Loose check vs pure f32 semantics.
    _, logits2_ref, loss2_ref = _reference(x2, W2, label2, margin, scale)
    assert jnp.allclose(logits2, logits2_ref, atol=0.25)
    assert jnp.allclose(loss2, loss2_ref, atol=0.1)
    # Tight check vs a precision-matched (bf16-operand) reference.
    _, logits2_bref, loss2_bref = _reference(x2, W2, label2, margin, scale,
                                             mxu_dtype=jnp.bfloat16)
    assert jnp.allclose(logits2, logits2_bref, atol=2e-3)
    assert jnp.allclose(loss2, loss2_bref, atol=2e-3)

    print("KERNEL_OK")
</pallas_src>

<mosaic_0001>
module attributes {stable_mosaic.version = 11 : i64} {
  func.func @_amsoftmax_train_kernel(%arg0: i32, %arg1: i32, %arg2: memref<8x32xf32, #tpu.memory_space<vmem>>, %arg3: memref<32x128xf32, #tpu.memory_space<vmem>>, %arg4: memref<8x1xf32, #tpu.memory_space<vmem>>, %arg5: memref<1x128xf32, #tpu.memory_space<vmem>>, %arg6: memref<8x1xi32, #tpu.memory_space<vmem>>, %arg7: memref<8x128xf32, #tpu.memory_space<vmem>>, %arg8: memref<8x1xf32, #tpu.memory_space<vmem>>, %arg9: memref<8x1xf32, #tpu.memory_space<vmem>>, %arg10: memref<8x1xf32, #tpu.memory_space<vmem>>) attributes {dimension_semantics = [#tpu.dimension_semantics<parallel>, #tpu.dimension_semantics<arbitrary>], iteration_bounds = array<i64: 1, 1>, scalar_prefetch = 0 : i64, scratch_operands = 2 : i64, tpu.core_type = #tpu.core_type<tc>, window_params = [{transform_indices = @transform_0, window_bounds = array<i64: 8, 32>}, {transform_indices = @transform_1, window_bounds = array<i64: 32, 128>}, {transform_indices = @transform_2, window_bounds = array<i64: 8, 1>}, {transform_indices = @transform_3, window_bounds = array<i64: 1, 128>}, {transform_indices = @transform_4, window_bounds = array<i64: 8, 1>}, {transform_indices = @transform_5, window_bounds = array<i64: 8, 128>}, {transform_indices = @transform_6, window_bounds = array<i64: 8, 1>}]} {
    %c0_i32 = arith.constant 0 : i32
    %0 = arith.cmpi eq, %arg1, %c0_i32 : i32
    %1 = arith.extui %0 : i1 to i32
    %c0_i32_0 = arith.constant 0 : i32
    %2 = arith.cmpi ne, %1, %c0_i32_0 : i32
    scf.if %2 {
      %cst_28 = arith.constant 0.000000e+00 : f32
      %42 = vector.broadcast %cst_28 : f32 to vector<8x1xf32>
      %c0_29 = arith.constant 0 : index
      %c0_30 = arith.constant 0 : index
      %43 = vector.load %arg9[%c0_29, %c0_30] : memref<8x1xf32, #tpu.memory_space<vmem>>, vector<8x1xf32>
      tpu.vector_store %arg9[%c0_29, %c0_30], %42 {strides = array<i32>} : memref<8x1xf32, #tpu.memory_space<vmem>>, vector<8x1xf32>,
      %cst_31 = arith.constant 0.000000e+00 : f32
      %44 = vector.broadcast %cst_31 : f32 to vector<8x1xf32>
      %c0_32 = arith.constant 0 : index
      %c0_33 = arith.constant 0 : index
      %45 = vector.load %arg10[%c0_32, %c0_33] : memref<8x1xf32, #tpu.memory_space<vmem>>, vector<8x1xf32>
      tpu.vector_store %arg10[%c0_32, %c0_33], %44 {strides = array<i32>} : memref<8x1xf32, #tpu.memory_space<vmem>>, vector<8x1xf32>,
    } else {
    }
    %c0 = arith.constant 0 : index
    %c0_1 = arith.constant 0 : index
    %3 = vector.load %arg2[%c0, %c0_1] : memref<8x32xf32, #tpu.memory_space<vmem>>, vector<8x32xf32>
    %c0_2 = arith.constant 0 : index
    %c0_3 = arith.constant 0 : index
    %4 = vector.load %arg3[%c0_2, %c0_3] : memref<32x128xf32, #tpu.memory_space<vmem>>, vector<32x128xf32>
    %cst = arith.constant dense<0.000000e+00> : vector<8x128xf32>
    %5 = tpu.matmul %3, %4, %cst {dimension_numbers = #tpu.dot_dimension_numbers<[1], [0], [0], [1], [0, 0, 1, 1], [], []>} : vector<8x32xf32>, vector<32x128xf32>, vector<8x128xf32> -> vector<8x128xf32>
    %c0_4 = arith.constant 0 : index
    %c0_5 = arith.constant 0 : index
    %6 = vector.load %arg4[%c0_4, %c0_5] : memref<8x1xf32, #tpu.memory_space<vmem>>, vector<8x1xf32>
    %7 = vector.broadcast %6 : vector<8x1xf32> to vector<8x128xf32>
    %8 = arith.mulf %5, %7 : vector<8x128xf32>
    %c128_i32 = arith.constant 128 : i32
    %9 = arith.muli %arg1, %c128_i32 : i32
    %10 = tpu.iota {dimensions = array<i32: 1>} : vector<8x128xi32>
    %11 = vector.broadcast %9 : i32 to vector<8x128xi32>
    %12 = arith.addi %11, %10 : vector<8x128xi32>
    %c0_6 = arith.constant 0 : index
    %c0_7 = arith.constant 0 : index
    %13 = vector.load %arg6[%c0_6, %c0_7] : memref<8x1xi32, #tpu.memory_space<vmem>>, vector<8x1xi32>
    %14 = vector.broadcast %13 : vector<8x1xi32> to vector<8x128xi32>
    %15 = arith.cmpi eq, %12, %14 : vector<8x128xi32>
    %cst_8 = arith.constant 3.000000e+00 : f32
    %cst_9 = arith.constant 0.000000e+00 : f32
    %16 = vector.broadcast %cst_8 : f32 to vector<8x128xf32>
    %17 = vector.broadcast %cst_9 : f32 to vector<8x128xf32>
    %18 = arith.select %15, %16, %17 : vector<8x128xi1>, vector<8x128xf32>
    %19 = arith.subf %8, %18 : vector<8x128xf32>
    %c0_10 = arith.constant 0 : index
    %c0_11 = arith.constant 0 : index
    %20 = vector.load %arg7[%c0_10, %c0_11] : memref<8x128xf32, #tpu.memory_space<vmem>>, vector<8x128xf32>
    tpu.vector_store %arg7[%c0_10, %c0_11], %19 {strides = array<i32>} : memref<8x128xf32, #tpu.memory_space<vmem>>, vector<8x128xf32>,
    %c0_12 = arith.constant 0 : index
    %c0_13 = arith.constant 0 : index
    %21 = vector.load %arg5[%c0_12, %c0_13] : memref<1x128xf32, #tpu.memory_space<vmem>>, vector<1x128xf32>
    %22 = vector.broadcast %21 : vector<1x128xf32> to vector<8x128xf32>
    %23 = arith.addf %19, %22 : vector<8x128xf32>
    %c0_14 = arith.constant 0 : index
    %c0_15 = arith.constant 0 : index
    %24 = vector.load %arg9[%c0_14, %c0_15] : memref<8x1xf32, #tpu.memory_space<vmem>>, vector<8x1xf32>
    %cst_16 = arith.constant 1.500000e+01 : f32
    %25 = vector.broadcast %cst_16 : f32 to vector<8x128xf32>
    %26 = arith.subf %23, %25 : vector<8x128xf32>
    %27 = math.exp %26 : vector<8x128xf32>
    %cst_17 = arith.constant dense<0.000000e+00> : vector<8xf32>
    %28 = vector.multi_reduction <add>, %27, %cst_17 [1] : vector<8x128xf32> to vector<8xf32>
    %29 = vector.shape_cast %28 : vector<8xf32> to vector<8x1xf32>
    %30 = arith.addf %24, %29 : vector<8x1xf32>
    %c0_18 = arith.constant 0 : index
    %c0_19 = arith.constant 0 : index
    %31 = vector.load %arg9[%c0_18, %c0_19] : memref<8x1xf32, #tpu.memory_space<vmem>>, vector<8x1xf32>
    tpu.vector_store %arg9[%c0_18, %c0_19], %30 {strides = array<i32>} : memref<8x1xf32, #tpu.memory_space<vmem>>, vector<8x1xf32>,
    %c0_20 = arith.constant 0 : index
    %c0_21 = arith.constant 0 : index
    %32 = vector.load %arg10[%c0_20, %c0_21] : memref<8x1xf32, #tpu.memory_space<vmem>>, vector<8x1xf32>
    %cst_22 = arith.constant 0.000000e+00 : f32
    %33 = vector.broadcast %cst_22 : f32 to vector<8x128xf32>
    %34 = arith.select %15, %19, %33 : vector<8x128xi1>, vector<8x128xf32>
    %cst_23 = arith.constant dense<0.000000e+00> : vector<8xf32>
    %35 = vector.multi_reduction <add>, %34, %cst_23 [1] : vector<8x128xf32> to vector<8xf32>
    %36 = vector.shape_cast %35 : vector<8xf32> to vector<8x1xf32>
    %37 = arith.addf %32, %36 : vector<8x1xf32>
    %c0_24 = arith.constant 0 : index
    %c0_25 = arith.constant 0 : index
    %38 = vector.load %arg10[%c0_24, %c0_25] : memref<8x1xf32, #tpu.memory_space<vmem>>, vector<8x1xf32>
    tpu.vector_store %arg10[%c0_24, %c0_25], %37 {strides = array<i32>} : memref<8x1xf32, #tpu.memory_space<vmem>>, vector<8x1xf32>,
    %c0_i32_26 = arith.constant 0 : i32
    %39 = arith.cmpi eq, %arg1, %c0_i32_26 : i32
    %40 = arith.extui %39 : i1 to i32
    %c0_i32_27 = arith.constant 0 : i32
    %41 = arith.cmpi ne, %40, %c0_i32_27 : i32
    scf.if %41 {
      %c0_28 = arith.constant 0 : index
      %c0_29 = arith.constant 0 : index
      %42 = vector.load %arg9[%c0_28, %c0_29] : memref<8x1xf32, #tpu.memory_space<vmem>>, vector<8x1xf32>
      %43 = math.log %42 : vector<8x1xf32>
      %cst_30 = arith.constant 1.500000e+01 : f32
      %44 = vector.broadcast %cst_30 : f32 to vector<8x1xf32>
      %45 = arith.addf %44, %43 : vector<8x1xf32>
      %c0_31 = arith.constant 0 : index
      %c0_32 = arith.constant 0 : index
      %46 = vector.load %arg10[%c0_31, %c0_32] : memref<8x1xf32, #tpu.memory_space<vmem>>, vector<8x1xf32>
      %47 = arith.subf %45, %46 : vector<8x1xf32>
      %c0_33 = arith.constant 0 : index
      %c0_34 = arith.constant 0 : index
      %48 = vector.load %arg8[%c0_33, %c0_34] : memref<8x1xf32, #tpu.memory_space<vmem>>, vector<8x1xf32>
      tpu.vector_store %arg8[%c0_33, %c0_34], %47 {strides = array<i32>} : memref<8x1xf32, #tpu.memory_space<vmem>>, vector<8x1xf32>,
    } else {
    }
    return
  }
  func.func @transform_0(%arg0: i32, %arg1: i32) -> (i32, i32) {
    %c0_i32 = arith.constant 0 : i32
    %c0_i32_0 = arith.constant 0 : i32
    return %arg0, %c0_i32 : i32, i32
  }
  func.func @transform_1(%arg0: i32, %arg1: i32) -> (i32, i32) {
    %c0_i32 = arith.constant 0 : i32
    %c0_i32_0 = arith.constant 0 : i32
    return %c0_i32, %arg1 : i32, i32
  }
  func.func @transform_2(%arg0: i32, %arg1: i32) -> (i32, i32) {
    %c0_i32 = arith.constant 0 : i32
    %c0_i32_0 = arith.constant 0 : i32
    return %arg0, %c0_i32 : i32, i32
  }
  func.func @transform_3(%arg0: i32, %arg1: i32) -> (i32, i32) {
    %c0_i32 = arith.constant 0 : i32
    %c0_i32_0 = arith.constant 0 : i32
    return %c0_i32, %arg1 : i32, i32
  }
  func.func @transform_4(%arg0: i32, %arg1: i32) -> (i32, i32) {
    %c0_i32 = arith.constant 0 : i32
    %c0_i32_0 = arith.constant 0 : i32
    return %arg0, %c0_i32 : i32, i32
  }
  func.func @transform_5(%arg0: i32, %arg1: i32) -> (i32, i32) {
    %c0_i32 = arith.constant 0 : i32
    return %arg0, %arg1 : i32, i32
  }
  func.func @transform_6(%arg0: i32, %arg1: i32) -> (i32, i32) {
    %c0_i32 = arith.constant 0 : i32
    %c0_i32_0 = arith.constant 0 : i32
    return %arg0, %c0_i32 : i32, i32
  }
}

</mosaic_0001>

<llo_original>
// kernel: tpu_custom_call.1
$region0: #{tpu_custom_call.1}
  #allocation0 [shape = 'u32[]', space=smem, size = 0x4, offset = 0x4, fixed_abs, tag = 'smem constant byte address 0x4 - core index']
  #allocation1 [shape = 'u32[144,128]{1,0:T(1,128)}', space=vmem, size = 0x12000, scoped, tag = 'internal scratch']
  #allocation2 [shape = 'f32[8,1]{1,0:T(8,128)}', space=vmem, size = 0x1000, scoped, tag = 'scratch operand']
  #allocation3 [shape = 'f32[8,1]{1,0:T(8,128)}', space=vmem, size = 0x1000, scoped, tag = 'scratch operand']
  %s0 = inlined_call_operand.vmem [shape: f32[8,32], index: 0, kind: input, shape index: {}]
  %s1 = inlined_call_operand.hbm [shape: f32[32,128], index: 1, kind: input, shape index: {}]
  %s2 = inlined_call_operand.vmem [shape: f32[8,1], index: 2, kind: input, shape index: {}]
  %s3 = inlined_call_operand.vmem [shape: f32[1,128], index: 3, kind: input, shape index: {}]
  %s4 = inlined_call_operand.vmem [shape: s32[8,1], index: 4, kind: input, shape index: {}]
  %s5 = inlined_call_operand.hbm [shape: f32[8,128], index: 5, kind: output, shape index: {0}]
  %s6 = inlined_call_operand.vmem [shape: f32[8,1], index: 6, kind: output, shape index: {1}]
  %7 = xla_tuple %s5, %s6
  %s8 = sld [smem:[#allocation0]]
  $region50: #{tpu_custom_call.1} parent=0
    _
  %s10 = ssub.s32 1, %s8
  %s11 = scalar_select 0, %s10, %s8
  $region1: #{tpu_custom_call.1} parent=0
    #allocation4 [shape = 'u8[16384]{0}', space=vmem, size = 0x4000, scoped, tag = 'input window, operand 1, single buffered']
    #allocation5 [shape = 's32[1]{0}', space=sflag, size = 0x4, scoped, tag = 'scoped memory for tpu_custom_call.1']
    #allocation6 [shape = 's32[1]{0}', space=sflag, size = 0x4, scoped, tag = 'scoped memory for tpu_custom_call.1']
    #allocation7 [shape = 'u8[4096]{0}', space=vmem, size = 0x1000, scoped, tag = 'output window, operand 0, single buffered']
    %12 = vsyncpa [#allocation5], 0
    %13 = vsyncpa [#allocation6], 0
    // Predicated region
    $region2: #{tpu_custom_call.1} parent=1 // pred_check
      _
    $region3: #{tpu_custom_call.1} parent=1 // pred_check_branch
      %15 = sbr.rel (0) target = $region5
    $region4: #{tpu_custom_call.1} parent=1 // pred_region
      _
    $region5: #{tpu_custom_call.1} parent=1 // pred_fallthru
      _
    // Predicated region
    $region6: #{tpu_custom_call.1} parent=1 // pred_check
      _
    $region7: #{tpu_custom_call.1} parent=1 // pred_check_branch
      %17 = sbr.rel (0) target = $region9
    $region8: #{tpu_custom_call.1} parent=1 // pred_region
      %s19 = ssub.s32 512, 512
      %20 = vsyncadd [#allocation5], %s19
      %s21 = sshll.u32 [#allocation4], 4
      %s22 = int_to_ptr.vmem [resolvable:$true] %s21
      %27 = dma.hbm_to_vmem [thread:$0]  %s1, 512, %s22, [#allocation5], 128, 128, 8
    $region9: #{tpu_custom_call.1} parent=1 // pred_fallthru
      _
    // Predicated region
    $region10: #{tpu_custom_call.1} parent=1 // pred_check
      _
    $region11: #{tpu_custom_call.1} parent=1 // pred_check_branch
      %29 = sbr.rel (0) target = $region13
    $region12: #{tpu_custom_call.1} parent=1 // pred_region
      _
    $region13: #{tpu_custom_call.1} parent=1 // pred_fallthru
      _
    // Predicated region
    $region14: #{tpu_custom_call.1} parent=1 // pred_check
      _
    $region15: #{tpu_custom_call.1} parent=1 // pred_check_branch
      %31 = sbr.rel (0) target = $region17
    $region16: #{tpu_custom_call.1} parent=1 // pred_region
      _
    $region17: #{tpu_custom_call.1} parent=1 // pred_fallthru
      _
    // Predicated region
    $region18: #{tpu_custom_call.1} parent=1 // pred_check
      _
    $region19: #{tpu_custom_call.1} parent=1 // pred_check_branch
      %33 = sbr.rel (0) target = $region21
    $region20: #{tpu_custom_call.1} parent=1 // pred_region
      _
    $region21: #{tpu_custom_call.1} parent=1 // pred_fallthru
      _
    // Predicated region
    $region22: #{tpu_custom_call.1} parent=1 // pred_check
      _
    $region23: #{tpu_custom_call.1} parent=1 // pred_check_branch
      %35 = sbr.rel (0) target = $region25
    $region24: #{tpu_custom_call.1} parent=1 // pred_region
      %36 = dma.done [#allocation5], 512
    $region25: #{tpu_custom_call.1} parent=1 // pred_fallthru
      _
    %p37 = scmp.eq.s32.totalorder 0, 0
    // Predicated region
    $region26: #{tpu_custom_call.1} parent=1 // pred_check
      %p38 = pneg %p37
    $region27: #{tpu_custom_call.1} parent=1 // pred_check_branch
      %40 = sbr.rel (%p38) target = $region29
    $region28: #{tpu_custom_call.1} parent=1 // pred_region
      %vm41 = vcmask 7168
      %42 = vst.msk [vmem:[#allocation2] sm:$0xff] %vm41, 0.0
      %43 = vst.msk [vmem:[#allocation3] sm:$0xff] %vm41, 0.0
    $region29: #{tpu_custom_call.1} parent=1 // pred_fallthru
      _
    %v44 = vld [vmem:[%s0] sm:$0xff]
    %v45 = vld [vmem:[#allocation4] sm:$0xff]
    %v46 = vld [vmem:[#allocation4 + $0x8] sm:$0xff]
    %v47 = vld [vmem:[#allocation4 + $0x10] sm:$0xff]
    %v48 = vld [vmem:[#allocation4 + $0x18] sm:$0xff]
    %vm49 = vcmask 261120
    %v51 = vsel %vm49, %v44, 0
    %53 = vmatprep.subr.mxu0 0.0
    %54 = vmatpush1.msra.mxu0 %v45
    %55 = vmatprep.subr.mxu0 0.0
    %56 = vmatpush1.msra.mxu0 %v46
    %57 = vmatprep.subr.mxu0 0.0
    %58 = vmatpush1.msra.mxu0 %v47
    %59 = vmatprep.subr.mxu0 0.0
    %60 = vmatpush1.msra.mxu0 %v48
    %61 = vmatprep.subr.mxu0 0.0
    %62 = vmatpush1.msra.mxu0 0.0
    %63 = vmatprep.subr.mxu0 0.0
    %64 = vmatpush1.msra.mxu0 0.0
    %65 = vmatprep.subr.mxu0 0.0
    %66 = vmatpush1.msra.mxu0 0.0
    %67 = vmatprep.subr.mxu0 0.0
    %68 = vmatpush1.msra.mxu0 0.0
    %69 = vmatprep.subr.mxu0 0.0
    %70 = vmatpush1.msra.mxu0 0.0
    %71 = vmatprep.subr.mxu0 0.0
    %72 = vmatpush1.msra.mxu0 0.0
    %73 = vmatprep.subr.mxu0 0.0
    %74 = vmatpush1.msra.mxu0 0.0
    %75 = vmatprep.subr.mxu0 0.0
    %76 = vmatpush1.msra.mxu0 0.0
    %77 = vmatprep.subr.mxu0 0.0
    %78 = vmatpush1.msra.mxu0 0.0
    %79 = vmatprep.subr.mxu0 0.0
    %80 = vmatpush1.msra.mxu0 0.0
    %81 = vmatprep.subr.mxu0 0.0
    %82 = vmatpush1.msra.mxu0 0.0
    %83 = vmatprep.subr.mxu0 0.0
    %84 = vmatpush1.msra.mxu0 0.0
    %85 = vmatprep.subr.mxu0 0.0
    %86 = vmatpush1.msra.mxu0 0.0
    %87 = vmatprep.subr.mxu0 0.0
    %88 = vmatpush1.msra.mxu0 0.0
    %89 = vmatprep.subr.mxu0 0.0
    %90 = vmatpush1.msra.mxu0 0.0
    %91 = vmatprep.subr.mxu0 0.0
    %92 = vmatpush1.msra.mxu0 0.0
    %93 = vmatprep.subr.mxu0 0.0
    %94 = vmatpush1.msra.mxu0 0.0
    %95 = vmatprep.subr.mxu0 0.0
    %96 = vmatpush1.msra.mxu0 0.0
    %97 = vmatprep.subr.mxu0 0.0
    %98 = vmatpush1.msra.mxu0 0.0
    %99 = vmatprep.subr.mxu0 0.0
    %100 = vmatpush1.msra.mxu0 0.0
    %101 = vmatprep.subr.mxu0 0.0
    %102 = vmatpush1.msra.mxu0 0.0
    %103 = vmatprep.subr.mxu0 0.0
    %104 = vmatpush1.msra.mxu0 0.0
    %105 = vmatprep.subr.mxu0 0.0
    %106 = vmatpush1.msra.mxu0 0.0
    %107 = vmatprep.subr.mxu0 0.0
    %108 = vmatpush1.msra.mxu0 0.0
    %109 = vmatprep.subr.mxu0 0.0
    %110 = vmatpush1.msra.mxu0 0.0
    %111 = vmatprep.subr.mxu0 0.0
    %112 = vmatpush1.msra.mxu0 0.0
    %113 = vmatprep.subr.mxu0 0.0
    %114 = vmatpush1.msra.mxu0 0.0
    %115 = vmatprep.subr.mxu0 0.0
    %116 = vmatpush1.msra.mxu0 0.0
    %117 = vmatprep.mubr.f32.mxu0 0.0
    %118 = vmatmul.mubr.f32.gmra.mrb[0].mxu0 %v51
    %v119 = vpop.f32.mrb[0].mxu0
    %v120 = vadd.f32 0.0, %v119
    %v121 = vpop.f32.mrb[0].mxu0
    %122 = vdwg.mxu0
    %v123 = vld [vmem:[%s2] sm:$0xff]
    %125 = vset.pattern.permute.xlu0 0
    %126 = vperm.xlu0 %125, %v123
    %v127 = vpop.permute.xlu0 %126
    %v129 = vmul.f32 %v120, %v127
    %s130 = smul.u32 0, 128
    %v131 = vlaneseq
    %v132 = vand.u32 %v131, 127
    %v133 = vstv %s130
    %v134 = vadd.s32 %v133, %v132
    %v135 = vld [vmem:[%s4] sm:$0xff]
    %136 = vset.pattern.permute.xlu0 0
    %137 = vperm.xlu0 %136, %v135
    %v138 = vpop.permute.xlu0 %137
    %vm139 = vcmp.eq.s32.totalorder %v134, %v138
    %v140 = vsel %vm139, 3.0, 0.0
    %v141 = vsub.f32 %v129, %v140
    %142 = vst [vmem:[#allocation7] sm:$0xff] %v141
    %v143 = vld [vmem:[%s3] sm:$0x1]
    %v145 = vlaneseq
    %v146 = vshrl.u32 %v145, 7
    %v147 = vsub.s32 0, %v146
    %v148 = vrot.slane %v143, %v147
    %v150 = vadd.f32 %v141, %v148
    %v151 = vld [vmem:[#allocation2] sm:$0xff]
    %v152 = vsub.f32 %v150, 15.0
    %v153 = vmul.f32 %v152, 1.442695
    %v154 = vpow.pop %v153
    %155 = vadd.xlane.f32.xlu0 %v154
    %v156 = vpop.xlane.xlu0 %155
    %v157 = vadd.f32 %v151, %v156
    %vm158 = vcmask 7168
    %159 = vst.msk [vmem:[#allocation2] sm:$0xff] %vm158, %v157
    %v160 = vld [vmem:[#allocation3] sm:$0xff]
    %v161 = vsel %vm139, %v141, 0.0
    %162 = vadd.xlane.f32.xlu0 %v161
    %v163 = vpop.xlane.xlu0 %162
    %v164 = vadd.f32 %v160, %v163
    %165 = vst.msk [vmem:[#allocation3] sm:$0xff] %vm158, %v164
    // Predicated region
    $region30: #{tpu_custom_call.1} parent=1 // pred_check
      %p166 = pneg %p37
    $region31: #{tpu_custom_call.1} parent=1 // pred_check_branch
      %168 = sbr.rel (%p166) target = $region33
    $region32: #{tpu_custom_call.1} parent=1 // pred_region
      %v169 = vld [vmem:[#allocation2] sm:$0xff]
      %v170 = vlog2.pop %v169
      %v171 = vmul.f32 %v170, 0.6931472
      %v172 = vadd.f32 %v171, 15.0
      %v173 = vld [vmem:[#allocation3] sm:$0xff]
      %v174 = vsub.f32 %v172, %v173
      %175 = vst.msk [vmem:[%s6] sm:$0xff] %vm158, %v174
    $region33: #{tpu_custom_call.1} parent=1 // pred_fallthru
      _
    // Predicated region
    $region34: #{tpu_custom_call.1} parent=1 // pred_check
      _
    $region35: #{tpu_custom_call.1} parent=1 // pred_check_branch
      %177 = sbr.rel (0) target = $region37
    $region36: #{tpu_custom_call.1} parent=1 // pred_region
      %s179 = ssub.s32 128, 128
      %180 = vsyncadd [#allocation6], %s179
      %s182 = sshll.u32 [#allocation7], 4
      %s183 = int_to_ptr.vmem [resolvable:$true] %s182
      %185 = dma.vmem_to_hbm [thread:$0]  %s183, 128, %s5, [#allocation6]
    $region37: #{tpu_custom_call.1} parent=1 // pred_fallthru
      _
    // Predicated region
    $region38: #{tpu_custom_call.1} parent=1 // pred_check
      _
    $region39: #{tpu_custom_call.1} parent=1 // pred_check_branch
      %187 = sbr.rel (0) target = $region41
    $region40: #{tpu_custom_call.1} parent=1 // pred_region
      _
    $region41: #{tpu_custom_call.1} parent=1 // pred_fallthru
      _
    // Predicated region
    $region42: #{tpu_custom_call.1} parent=1 // pred_check
      _
    $region43: #{tpu_custom_call.1} parent=1 // pred_check_branch
      %189 = sbr.rel (0) target = $region45
    $region44: #{tpu_custom_call.1} parent=1 // pred_region
      %190 = dma.done [#allocation6], 128
    $region45: #{tpu_custom_call.1} parent=1 // pred_fallthru
      _
    // Predicated region
    $region46: #{tpu_custom_call.1} parent=1 // pred_check
      _
    $region47: #{tpu_custom_call.1} parent=1 // pred_check_branch
      %192 = sbr.rel (0) target = $region49
    $region48: #{tpu_custom_call.1} parent=1 // pred_region
      _
    $region49: #{tpu_custom_call.1} parent=1 // pred_fallthru
      _
    %193 = vsyncpa [#allocation5], 1
    %194 = vsyncpa [#allocation6], 1

</llo_original>
